<compile_context>
chip_gen: v7x
topology: tpu7x:2x2x1
jax: 0.10.0
libtpu: 0.0.40
codegen_flags: <defaults>
</compile_context>

<pallas_src>
import jax
import jax.numpy as jnp
from jax.experimental import pallas as pl
from jax.experimental.pallas import tpu as pltpu

INPUT_DIM = 170   # N_entradas
H1, H2, H3 = 32, 128, 32
OUTPUT_DIM = 25   # wlen_mfcc

OUT_PAD = 128        # output padded to one lane group -> unmasked stores
MIN_TILE = 16        # bf16 sublane tile for the output block
DEFAULT_TILE_B = 2048


def _round_up(n, m):
    return (n + m - 1) // m * m


def dnn_kernel(x_ref,
               w1_ref, b1_ref,
               w2_ref, b2_ref,
               w3_ref, b3_ref,
               w4_ref, b4_ref,
               o_ref):
    # Fused 4-layer MLP on one batch tile; bf16 MXU inputs, f32 accumulation.
    x = x_ref[...].astype(jnp.bfloat16)                          # (tile_b, 170) cast in-kernel

    h = jnp.dot(x, w1_ref[...], preferred_element_type=jnp.float32) + b1_ref[...]
    h = jnp.maximum(h, 0.0).astype(jnp.bfloat16)                 # dropout -> identity (eval)

    h = jnp.dot(h, w2_ref[...], preferred_element_type=jnp.float32) + b2_ref[...]
    h = jnp.maximum(h, 0.0).astype(jnp.bfloat16)

    h = jnp.dot(h, w3_ref[...], preferred_element_type=jnp.float32) + b3_ref[...]
    h = jnp.maximum(h, 0.0).astype(jnp.bfloat16)

    h = jnp.dot(h, w4_ref[...], preferred_element_type=jnp.float32) + b4_ref[...]
    h = jnp.maximum(h, 0.0)

    o_ref[...] = h.astype(o_ref.dtype)                           # (tile_b, 128) bf16, lane-dense


def red_neuronal_dnn(x, params, tile_b=DEFAULT_TILE_B, return_padded=False):
    """x: (B, 170) float32. Returns (B, 25) bf16 (or padded (b_pad, 128) bf16)."""
    B = x.shape[0]

    # --- tile-size selection ---
    b_req = _round_up(B, MIN_TILE)
    tb = max(MIN_TILE, min(_round_up(tile_b, MIN_TILE), b_req))
    # v7x megacore: ensure >= 2 grid steps when the batch is big enough so both
    # TensorCores shard the "parallel" axis.
    if b_req >= 2 * MIN_TILE:
        half = _round_up((b_req + 1) // 2, MIN_TILE)
        tb = min(tb, half)
    b_pad = _round_up(b_req, tb)

    # Cheap batch-row pad only (no dtype/lane repack of x on the host).
    x_in = x if b_pad == B else jnp.pad(x, ((0, b_pad - B), (0, 0)))

    # Weights: one-time tiny (~60 KiB) bf16 cast; biases stay f32.
    w1, b1 = params["hidden1"]
    w2, b2 = params["hidden2"]
    w3, b3 = params["hidden3"]
    w4, b4 = params["output"]
    w1_b = w1.astype(jnp.bfloat16)
    w2_b = w2.astype(jnp.bfloat16)
    w3_b = w3.astype(jnp.bfloat16)
    w4_p = jnp.zeros((H3, OUT_PAD), jnp.bfloat16).at[:, :OUTPUT_DIM].set(w4.astype(jnp.bfloat16))
    b4_p = jnp.zeros((1, OUT_PAD), jnp.float32).at[:, :OUTPUT_DIM].set(b4)

    grid = (b_pad // tb,)

    def resident(a):
        # Full-array block with a constant block index -> stays resident in VMEM.
        return pl.BlockSpec(a.shape, lambda i: (0,) * a.ndim)

    out = pl.pallas_call(
        dnn_kernel,
        out_shape=jax.ShapeDtypeStruct((b_pad, OUT_PAD), jnp.bfloat16),
        grid=grid,
        in_specs=[
            pl.BlockSpec((tb, INPUT_DIM), lambda i: (i, 0)),   # x streams per batch tile
            resident(w1_b), resident(b1),
            resident(w2_b), resident(b2),
            resident(w3_b), resident(b3),
            resident(w4_p), resident(b4_p),
        ],
        out_specs=pl.BlockSpec((tb, OUT_PAD), lambda i: (i, 0)),
        compiler_params=pltpu.CompilerParams(
            dimension_semantics=("parallel",)),
    )(x_in, w1_b, b1, w2_b, b2, w3_b, b3, w4_p, b4_p)

    if return_padded:
        return out                      # (b_pad, 128) bf16; cols >= 25 are exactly zero
    return out[:B, :OUTPUT_DIM]


def init_params(key):
    """Deterministic init mimicking nn.Linear default (uniform +/-1/sqrt(fan_in)).
    Weights stored as (in_features, out_features) so y = x @ W + b."""
    dims = [(INPUT_DIM, H1), (H1, H2), (H2, H3), (H3, OUTPUT_DIM)]
    names = ["hidden1", "hidden2", "hidden3", "output"]
    params = {}
    for name, (fan_in, fan_out) in zip(names, dims):
        key, kw, kb = jax.random.split(key, 3)
        bound = 1.0 / (fan_in ** 0.5)
        w = jax.random.uniform(kw, (fan_in, fan_out), jnp.float32, -bound, bound)
        b = jax.random.uniform(kb, (1, fan_out), jnp.float32, -bound, bound)
        params[name] = (w, b)
    return params


def reference_forward(x, params, mirror_kernel=True):
    """Pure-JAX reference. mirror_kernel=True reproduces the kernel's bf16-in /
    f32-accumulate math; False is the faithful all-f32 PyTorch forward."""
    names = ["hidden1", "hidden2", "hidden3", "output"]
    h = x.astype(jnp.bfloat16) if mirror_kernel else x
    for name in names:
        w, b = params[name]
        if mirror_kernel:
            h = jnp.dot(h, w.astype(jnp.bfloat16),
                        preferred_element_type=jnp.float32) + b
        else:
            h = jnp.dot(h, w) + b
        h = jnp.maximum(h, 0.0)
        if mirror_kernel and name != "output":
            h = h.astype(jnp.bfloat16)
    return h


if __name__ == "__main__":
    key = jax.random.PRNGKey(0)
    kx, kp = jax.random.split(key)

    B = 8
    x = jax.random.normal(kx, (B, INPUT_DIM), jnp.float32)
    params = init_params(kp)

    out = red_neuronal_dnn(x, params)
    out = jax.block_until_ready(out)
    assert out.shape == (B, OUTPUT_DIM)

    out_f32 = out.astype(jnp.float32)

    # Tight check against a reference that mirrors the kernel's bf16 math.
    ref_bf16 = reference_forward(x, params, mirror_kernel=True)
    ref_bf16 = ref_bf16.astype(jnp.bfloat16).astype(jnp.float32)
    assert jnp.allclose(out_f32, ref_bf16, atol=1e-2, rtol=1e-2), (
        float(jnp.max(jnp.abs(out_f32 - ref_bf16))))

    # Loose sanity check against the faithful f32 PyTorch-semantics forward.
    ref_f32 = reference_forward(x, params, mirror_kernel=False)
    assert jnp.allclose(out_f32, ref_f32, atol=1e-1, rtol=1e-1), (
        float(jnp.max(jnp.abs(out_f32 - ref_f32))))

    print("KERNEL_OK")
</pallas_src>

<mosaic_0001>
module attributes {stable_mosaic.version = 11 : i64} {
  func.func @dnn_kernel(%arg0: i32, %arg1: memref<16x170xf32, #tpu.memory_space<vmem>>, %arg2: memref<170x32xbf16, #tpu.memory_space<vmem>>, %arg3: memref<1x32xf32, #tpu.memory_space<vmem>>, %arg4: memref<32x128xbf16, #tpu.memory_space<vmem>>, %arg5: memref<1x128xf32, #tpu.memory_space<vmem>>, %arg6: memref<128x32xbf16, #tpu.memory_space<vmem>>, %arg7: memref<1x32xf32, #tpu.memory_space<vmem>>, %arg8: memref<32x128xbf16, #tpu.memory_space<vmem>>, %arg9: memref<1x128xf32, #tpu.memory_space<vmem>>, %arg10: memref<16x128xbf16, #tpu.memory_space<vmem>>) attributes {dimension_semantics = [#tpu.dimension_semantics<parallel>], iteration_bounds = array<i64: 1>, scalar_prefetch = 0 : i64, scratch_operands = 0 : i64, tpu.core_type = #tpu.core_type<tc>, window_params = [{transform_indices = @transform_0, window_bounds = array<i64: 16, 170>}, {pipeline_mode = #tpu.pipeline_mode<synchronous>, transform_indices = @transform_1, window_bounds = array<i64: 170, 32>}, {pipeline_mode = #tpu.pipeline_mode<synchronous>, transform_indices = @transform_2, window_bounds = array<i64: 1, 32>}, {pipeline_mode = #tpu.pipeline_mode<synchronous>, transform_indices = @transform_3, window_bounds = array<i64: 32, 128>}, {pipeline_mode = #tpu.pipeline_mode<synchronous>, transform_indices = @transform_4, window_bounds = array<i64: 1, 128>}, {pipeline_mode = #tpu.pipeline_mode<synchronous>, transform_indices = @transform_5, window_bounds = array<i64: 128, 32>}, {pipeline_mode = #tpu.pipeline_mode<synchronous>, transform_indices = @transform_6, window_bounds = array<i64: 1, 32>}, {pipeline_mode = #tpu.pipeline_mode<synchronous>, transform_indices = @transform_7, window_bounds = array<i64: 32, 128>}, {pipeline_mode = #tpu.pipeline_mode<synchronous>, transform_indices = @transform_8, window_bounds = array<i64: 1, 128>}, {transform_indices = @transform_9, window_bounds = array<i64: 16, 128>}]} {
    %c0 = arith.constant 0 : index
    %c0_0 = arith.constant 0 : index
    %0 = vector.load %arg1[%c0, %c0_0] : memref<16x170xf32, #tpu.memory_space<vmem>>, vector<16x170xf32>
    %1 = arith.truncf %0 : vector<16x170xf32> to vector<16x170xbf16>
    %c0_1 = arith.constant 0 : index
    %c0_2 = arith.constant 0 : index
    %2 = vector.load %arg2[%c0_1, %c0_2] : memref<170x32xbf16, #tpu.memory_space<vmem>>, vector<170x32xbf16>
    %cst = arith.constant dense<0.000000e+00> : vector<16x32xf32>
    %3 = tpu.matmul %1, %2, %cst {dimension_numbers = #tpu.dot_dimension_numbers<[1], [0], [0], [1], [0, 0, 1, 1], [], []>} : vector<16x170xbf16>, vector<170x32xbf16>, vector<16x32xf32> -> vector<16x32xf32>
    %c0_3 = arith.constant 0 : index
    %c0_4 = arith.constant 0 : index
    %4 = vector.load %arg3[%c0_3, %c0_4] : memref<1x32xf32, #tpu.memory_space<vmem>>, vector<1x32xf32>
    %5 = vector.broadcast %4 : vector<1x32xf32> to vector<16x32xf32>
    %6 = arith.addf %3, %5 : vector<16x32xf32>
    %cst_5 = arith.constant 0.000000e+00 : f32
    %7 = vector.broadcast %cst_5 : f32 to vector<16x32xf32>
    %8 = arith.maximumf %6, %7 : vector<16x32xf32>
    %9 = arith.truncf %8 : vector<16x32xf32> to vector<16x32xbf16>
    %c0_6 = arith.constant 0 : index
    %c0_7 = arith.constant 0 : index
    %10 = vector.load %arg4[%c0_6, %c0_7] : memref<32x128xbf16, #tpu.memory_space<vmem>>, vector<32x128xbf16>
    %cst_8 = arith.constant dense<0.000000e+00> : vector<16x128xf32>
    %11 = tpu.matmul %9, %10, %cst_8 {dimension_numbers = #tpu.dot_dimension_numbers<[1], [0], [0], [1], [0, 0, 1, 1], [], []>} : vector<16x32xbf16>, vector<32x128xbf16>, vector<16x128xf32> -> vector<16x128xf32>
    %c0_9 = arith.constant 0 : index
    %c0_10 = arith.constant 0 : index
    %12 = vector.load %arg5[%c0_9, %c0_10] : memref<1x128xf32, #tpu.memory_space<vmem>>, vector<1x128xf32>
    %13 = vector.broadcast %12 : vector<1x128xf32> to vector<16x128xf32>
    %14 = arith.addf %11, %13 : vector<16x128xf32>
    %cst_11 = arith.constant 0.000000e+00 : f32
    %15 = vector.broadcast %cst_11 : f32 to vector<16x128xf32>
    %16 = arith.maximumf %14, %15 : vector<16x128xf32>
    %17 = arith.truncf %16 : vector<16x128xf32> to vector<16x128xbf16>
    %c0_12 = arith.constant 0 : index
    %c0_13 = arith.constant 0 : index
    %18 = vector.load %arg6[%c0_12, %c0_13] : memref<128x32xbf16, #tpu.memory_space<vmem>>, vector<128x32xbf16>
    %cst_14 = arith.constant dense<0.000000e+00> : vector<16x32xf32>
    %19 = tpu.matmul %17, %18, %cst_14 {dimension_numbers = #tpu.dot_dimension_numbers<[1], [0], [0], [1], [0, 0, 1, 1], [], []>} : vector<16x128xbf16>, vector<128x32xbf16>, vector<16x32xf32> -> vector<16x32xf32>
    %c0_15 = arith.constant 0 : index
    %c0_16 = arith.constant 0 : index
    %20 = vector.load %arg7[%c0_15, %c0_16] : memref<1x32xf32, #tpu.memory_space<vmem>>, vector<1x32xf32>
    %21 = vector.broadcast %20 : vector<1x32xf32> to vector<16x32xf32>
    %22 = arith.addf %19, %21 : vector<16x32xf32>
    %cst_17 = arith.constant 0.000000e+00 : f32
    %23 = vector.broadcast %cst_17 : f32 to vector<16x32xf32>
    %24 = arith.maximumf %22, %23 : vector<16x32xf32>
    %25 = arith.truncf %24 : vector<16x32xf32> to vector<16x32xbf16>
    %c0_18 = arith.constant 0 : index
    %c0_19 = arith.constant 0 : index
    %26 = vector.load %arg8[%c0_18, %c0_19] : memref<32x128xbf16, #tpu.memory_space<vmem>>, vector<32x128xbf16>
    %cst_20 = arith.constant dense<0.000000e+00> : vector<16x128xf32>
    %27 = tpu.matmul %25, %26, %cst_20 {dimension_numbers = #tpu.dot_dimension_numbers<[1], [0], [0], [1], [0, 0, 1, 1], [], []>} : vector<16x32xbf16>, vector<32x128xbf16>, vector<16x128xf32> -> vector<16x128xf32>
    %c0_21 = arith.constant 0 : index
    %c0_22 = arith.constant 0 : index
    %28 = vector.load %arg9[%c0_21, %c0_22] : memref<1x128xf32, #tpu.memory_space<vmem>>, vector<1x128xf32>
    %29 = vector.broadcast %28 : vector<1x128xf32> to vector<16x128xf32>
    %30 = arith.addf %27, %29 : vector<16x128xf32>
    %cst_23 = arith.constant 0.000000e+00 : f32
    %31 = vector.broadcast %cst_23 : f32 to vector<16x128xf32>
    %32 = arith.maximumf %30, %31 : vector<16x128xf32>
    %33 = arith.truncf %32 : vector<16x128xf32> to vector<16x128xbf16>
    %c0_24 = arith.constant 0 : index
    %c0_25 = arith.constant 0 : index
    %34 = vector.load %arg10[%c0_24, %c0_25] : memref<16x128xbf16, #tpu.memory_space<vmem>>, vector<16x128xbf16>
    tpu.vector_store %arg10[%c0_24, %c0_25], %33 {strides = array<i32>} : memref<16x128xbf16, #tpu.memory_space<vmem>>, vector<16x128xbf16>,
    return
  }
  func.func @transform_0(%arg0: i32) -> (i32, i32) {
    %c0_i32 = arith.constant 0 : i32
    %c0_i32_0 = arith.constant 0 : i32
    return %arg0, %c0_i32 : i32, i32
  }
  func.func @transform_1(%arg0: i32) -> (i32, i32) {
    %c0_i32 = arith.constant 0 : i32
    %c0_i32_0 = arith.constant 0 : i32
    %c0_i32_1 = arith.constant 0 : i32
    return %c0_i32, %c0_i32_0 : i32, i32
  }
  func.func @transform_2(%arg0: i32) -> (i32, i32) {
    %c0_i32 = arith.constant 0 : i32
    %c0_i32_0 = arith.constant 0 : i32
    %c0_i32_1 = arith.constant 0 : i32
    return %c0_i32, %c0_i32_0 : i32, i32
  }
  func.func @transform_3(%arg0: i32) -> (i32, i32) {
    %c0_i32 = arith.constant 0 : i32
    %c0_i32_0 = arith.constant 0 : i32
    %c0_i32_1 = arith.constant 0 : i32
    return %c0_i32, %c0_i32_0 : i32, i32
  }
  func.func @transform_4(%arg0: i32) -> (i32, i32) {
    %c0_i32 = arith.constant 0 : i32
    %c0_i32_0 = arith.constant 0 : i32
    %c0_i32_1 = arith.constant 0 : i32
    return %c0_i32, %c0_i32_0 : i32, i32
  }
  func.func @transform_5(%arg0: i32) -> (i32, i32) {
    %c0_i32 = arith.constant 0 : i32
    %c0_i32_0 = arith.constant 0 : i32
    %c0_i32_1 = arith.constant 0 : i32
    return %c0_i32, %c0_i32_0 : i32, i32
  }
  func.func @transform_6(%arg0: i32) -> (i32, i32) {
    %c0_i32 = arith.constant 0 : i32
    %c0_i32_0 = arith.constant 0 : i32
    %c0_i32_1 = arith.constant 0 : i32
    return %c0_i32, %c0_i32_0 : i32, i32
  }
  func.func @transform_7(%arg0: i32) -> (i32, i32) {
    %c0_i32 = arith.constant 0 : i32
    %c0_i32_0 = arith.constant 0 : i32
    %c0_i32_1 = arith.constant 0 : i32
    return %c0_i32, %c0_i32_0 : i32, i32
  }
  func.func @transform_8(%arg0: i32) -> (i32, i32) {
    %c0_i32 = arith.constant 0 : i32
    %c0_i32_0 = arith.constant 0 : i32
    %c0_i32_1 = arith.constant 0 : i32
    return %c0_i32, %c0_i32_0 : i32, i32
  }
  func.func @transform_9(%arg0: i32) -> (i32, i32) {
    %c0_i32 = arith.constant 0 : i32
    %c0_i32_0 = arith.constant 0 : i32
    return %arg0, %c0_i32 : i32, i32
  }
}

</mosaic_0001>

<llo_original>
// kernel: tpu_custom_call.1
$region0: #{tpu_custom_call.1}
  #allocation0 [shape = 'u32[]', space=smem, size = 0x4, offset = 0x4, fixed_abs, tag = 'smem constant byte address 0x4 - core index']
  #allocation1 [shape = 'u32[144,128]{1,0:T(1,128)}', space=vmem, size = 0x12000, scoped, tag = 'internal scratch']
  %s0 = inlined_call_operand.vmem [shape: f32[16,170], index: 0, kind: input, shape index: {}]
  %s1 = inlined_call_operand.vmem [shape: bf16[170,32], index: 1, kind: input, shape index: {}]
  %s2 = inlined_call_operand.vmem [shape: f32[1,32], index: 2, kind: input, shape index: {}]
  %s3 = inlined_call_operand.vmem [shape: bf16[32,128], index: 3, kind: input, shape index: {}]
  %s4 = inlined_call_operand.vmem [shape: f32[1,128], index: 4, kind: input, shape index: {}]
  %s5 = inlined_call_operand.vmem [shape: bf16[128,32], index: 5, kind: input, shape index: {}]
  %s6 = inlined_call_operand.vmem [shape: f32[1,32], index: 6, kind: input, shape index: {}]
  %s7 = inlined_call_operand.vmem [shape: bf16[32,128], index: 7, kind: input, shape index: {}]
  %s8 = inlined_call_operand.vmem [shape: f32[1,128], index: 8, kind: input, shape index: {}]
  %s9 = inlined_call_operand.hbm [shape: bf16[16,128], index: 9, kind: output, shape index: {}]
  %s10 = sld [smem:[#allocation0]]
  $region46: #{tpu_custom_call.1} parent=0
    _
  %s12 = ssub.s32 1, %s10
  %s13 = scalar_select 0, %s12, %s10
  $region1: #{tpu_custom_call.1} parent=0
    #allocation2 [shape = 'u8[4096]{0}', space=vmem, size = 0x1000, scoped, tag = 'output window, operand 0, single buffered']
    #allocation3 [shape = 's32[1]{0}', space=sflag, size = 0x4, scoped, tag = 'scoped memory for tpu_custom_call.1']
    %14 = vsyncpa [#allocation3], 0
    // Predicated region
    $region2: #{tpu_custom_call.1} parent=1 // pred_check
      _
    $region3: #{tpu_custom_call.1} parent=1 // pred_check_branch
      %16 = sbr.rel (0) target = $region5
    $region4: #{tpu_custom_call.1} parent=1 // pred_region
      _
    $region5: #{tpu_custom_call.1} parent=1 // pred_fallthru
      _
    // Predicated region
    $region6: #{tpu_custom_call.1} parent=1 // pred_check
      _
    $region7: #{tpu_custom_call.1} parent=1 // pred_check_branch
      %18 = sbr.rel (0) target = $region9
    $region8: #{tpu_custom_call.1} parent=1 // pred_region
      _
    $region9: #{tpu_custom_call.1} parent=1 // pred_fallthru
      _
    // Predicated region
    $region10: #{tpu_custom_call.1} parent=1 // pred_check
      _
    $region11: #{tpu_custom_call.1} parent=1 // pred_check_branch
      %20 = sbr.rel (0) target = $region13
    $region12: #{tpu_custom_call.1} parent=1 // pred_region
      _
    $region13: #{tpu_custom_call.1} parent=1 // pred_fallthru
      _
    // Predicated region
    $region14: #{tpu_custom_call.1} parent=1 // pred_check
      _
    $region15: #{tpu_custom_call.1} parent=1 // pred_check_branch
      %22 = sbr.rel (0) target = $region17
    $region16: #{tpu_custom_call.1} parent=1 // pred_region
      _
    $region17: #{tpu_custom_call.1} parent=1 // pred_fallthru
      _
    // Predicated region
    $region18: #{tpu_custom_call.1} parent=1 // pred_check
      _
    $region19: #{tpu_custom_call.1} parent=1 // pred_check_branch
      %24 = sbr.rel (0) target = $region21
    $region20: #{tpu_custom_call.1} parent=1 // pred_region
      _
    $region21: #{tpu_custom_call.1} parent=1 // pred_fallthru
      _
    // Predicated region
    $region22: #{tpu_custom_call.1} parent=1 // pred_check
      _
    $region23: #{tpu_custom_call.1} parent=1 // pred_check_branch
      %26 = sbr.rel (0) target = $region25
    $region24: #{tpu_custom_call.1} parent=1 // pred_region
      _
    $region25: #{tpu_custom_call.1} parent=1 // pred_fallthru
      _
    // Predicated region
    $region26: #{tpu_custom_call.1} parent=1 // pred_check
      _
    $region27: #{tpu_custom_call.1} parent=1 // pred_check_branch
      %28 = sbr.rel (0) target = $region29
    $region28: #{tpu_custom_call.1} parent=1 // pred_region
      _
    $region29: #{tpu_custom_call.1} parent=1 // pred_fallthru
      _
    // Predicated region
    $region30: #{tpu_custom_call.1} parent=1 // pred_check
      _
    $region31: #{tpu_custom_call.1} parent=1 // pred_check_branch
      %30 = sbr.rel (0) target = $region33
    $region32: #{tpu_custom_call.1} parent=1 // pred_region
      _
    $region33: #{tpu_custom_call.1} parent=1 // pred_fallthru
      _
    // Predicated region
    $region34: #{tpu_custom_call.1} parent=1 // pred_check
      _
    $region35: #{tpu_custom_call.1} parent=1 // pred_check_branch
      %32 = sbr.rel (0) target = $region37
    $region36: #{tpu_custom_call.1} parent=1 // pred_region
      _
    $region37: #{tpu_custom_call.1} parent=1 // pred_fallthru
      _
    %v34 = vld [vmem:[%s0] sm:$0xff]
    %v35 = vld [vmem:[%s0 + $0x8] sm:$0xff]
    %v36 = vld [vmem:[%s0 + $0x10] sm:$0xff]
    %v37 = vld [vmem:[%s0 + $0x18] sm:$0xff]
    %v38 = vpack.c.bf16 %v36, %v34
    %v39 = vpack.c.bf16 %v37, %v35
    %v40 = vld [vmem:[%s1] sm:$0xf]
    %v41 = vld [vmem:[%s1 + $0x4] sm:$0xf]
    %v42 = vld [vmem:[%s1 + $0x8] sm:$0xf]
    %v43 = vld [vmem:[%s1 + $0xc] sm:$0xf]
    %v44 = vld [vmem:[%s1 + $0x10] sm:$0xf]
    %v45 = vld [vmem:[%s1 + $0x14] sm:$0xf]
    %v46 = vld [vmem:[%s1 + $0x18] sm:$0xf]
    %v47 = vld [vmem:[%s1 + $0x1c] sm:$0xf]
    %v48 = vld [vmem:[%s1 + $0x20] sm:$0xf]
    %v49 = vld [vmem:[%s1 + $0x24] sm:$0xf]
    %v50 = vld [vmem:[%s1 + $0x28] sm:$0xf]
    %v51 = vld [vmem:[%s1 + $0x2c] sm:$0xf]
    %v52 = vld [vmem:[%s1 + $0x30] sm:$0xf]
    %v53 = vld [vmem:[%s1 + $0x34] sm:$0xf]
    %v54 = vld [vmem:[%s1 + $0x38] sm:$0xf]
    %v55 = vld [vmem:[%s1 + $0x3c] sm:$0xf]
    %v56 = vld [vmem:[%s1 + $0x40] sm:$0xf]
    %v57 = vld [vmem:[%s1 + $0x44] sm:$0xf]
    %v58 = vld [vmem:[%s1 + $0x48] sm:$0xf]
    %v59 = vld [vmem:[%s1 + $0x4c] sm:$0xf]
    %v60 = vld [vmem:[%s1 + $0x50] sm:$0xf]
    %v61 = vld [vmem:[%s1 + $0x54] sm:$0x1]
    %v62 = vld [vmem:[%s2] sm:$0x1]
    %v64 = vlaneseq
    %v65 = vshrl.u32 %v64, 7
    %v66 = vsub.s32 0, %v65
    %v67 = vrot.slane %v62, %v66
    %v91 = vunpack.c.l.b16 %v40
    %v92 = vunpack.c.l.b16 %v41
    %v93 = vunpack.c.l.b16 %v42
    %v94 = vunpack.c.l.b16 %v43
    %v95 = vunpack.c.l.b16 %v44
    %v96 = vunpack.c.l.b16 %v45
    %v97 = vunpack.c.l.b16 %v46
    %v98 = vunpack.c.l.b16 %v47
    %v99 = vunpack.c.l.b16 %v48
    %v100 = vunpack.c.l.b16 %v49
    %v101 = vunpack.c.l.b16 %v50
    %v102 = vunpack.c.l.b16 %v51
    %v103 = vunpack.c.l.b16 %v52
    %v104 = vunpack.c.l.b16 %v53
    %v105 = vunpack.c.l.b16 %v54
    %v106 = vunpack.c.l.b16 %v55
    %v107 = vunpack.c.l.b16 %v56
    %v108 = vunpack.c.l.b16 %v57
    %v109 = vunpack.c.l.b16 %v58
    %v110 = vunpack.c.l.b16 %v59
    %v111 = vunpack.c.l.b16 %v60
    %v112 = vunpack.c.l.b16 %v61
    %v113 = vpack.c.b16 %v92, %v91
    %v114 = vpack.c.b16 %v94, %v93
    %v115 = vpack.c.b16 %v96, %v95
    %v116 = vpack.c.b16 %v98, %v97
    %v117 = vpack.c.b16 %v100, %v99
    %v118 = vpack.c.b16 %v102, %v101
    %v119 = vpack.c.b16 %v104, %v103
    %v120 = vpack.c.b16 %v106, %v105
    %v121 = vpack.c.b16 %v108, %v107
    %v122 = vpack.c.b16 %v110, %v109
    %v123 = vpack.c.b16 %v112, %v111
    %vm134 = vcmask 343040
    %v136 = vsel %vm134, %v39, 0
    %vm138 = vcmask 1044480
    %v140 = vsel %vm138, %v123, 0
    %142 = vmatprep.subr.bf16.mxu0 0
    %143 = vmatpush1.bf16.msra.mxu0 %v113
    %144 = vmatprep.subr.bf16.mxu0 0
    %145 = vmatpush1.bf16.msra.mxu0 %v114
    %146 = vmatprep.subr.bf16.mxu0 0
    %147 = vmatpush1.bf16.msra.mxu0 %v115
    %148 = vmatprep.subr.bf16.mxu0 0
    %149 = vmatpush1.bf16.msra.mxu0 %v116
    %150 = vmatprep.subr.bf16.mxu0 0
    %151 = vmatpush1.bf16.msra.mxu0 %v117
    %152 = vmatprep.subr.bf16.mxu0 0
    %153 = vmatpush1.bf16.msra.mxu0 %v118
    %154 = vmatprep.subr.bf16.mxu0 0
    %155 = vmatpush1.bf16.msra.mxu0 %v119
    %156 = vmatprep.subr.bf16.mxu0 0
    %157 = vmatpush1.bf16.msra.mxu0 %v120
    %158 = vmatprep.subr.bf16.mxu0 0
    %159 = vmatpush1.bf16.msra.mxu0 %v121
    %160 = vmatprep.subr.bf16.mxu0 0
    %161 = vmatpush1.bf16.msra.mxu0 %v122
    %162 = vmatprep.subr.bf16.mxu0 0
    %163 = vmatpush1.bf16.msra.mxu0 %v140
    %164 = vmatprep.subr.bf16.mxu0 0
    %165 = vmatpush1.bf16.msra.mxu0 0
    %166 = vmatprep.subr.bf16.mxu0 0
    %167 = vmatpush1.bf16.msra.mxu0 0
    %168 = vmatprep.subr.bf16.mxu0 0
    %169 = vmatpush1.bf16.msra.mxu0 0
    %170 = vmatprep.subr.bf16.mxu0 0
    %171 = vmatpush1.bf16.msra.mxu0 0
    %172 = vmatprep.subr.bf16.mxu0 0
    %173 = vmatpush1.bf16.msra.mxu0 0
    %174 = vmatprep.mubr.bf16.mxu0 %v136
    %175 = vmatmul.mubr.bf16.gmra.mrb[0].mxu0 %v38
    %v176 = vpop.f32.mrb[0].mxu0
    %v177 = vadd.f32 %v67, %v176
    %v178 = vpop.f32.mrb[0].mxu0
    %v179 = vpop.f32.mrb[0].mxu0
    %v180 = vadd.f32 %v67, %v179
    %v181 = vpop.f32.mrb[0].mxu0
    %182 = vdwg.mxu0
    %v183 = vmax.f32 %v177, 0.0
    %v184 = vmax.f32 %v180, 0.0
    %v185 = vpack.c.bf16 %v184, %v183
    %v186 = vld [vmem:[%s3] sm:$0xf]
    %v187 = vld [vmem:[%s3 + $0x4] sm:$0xf]
    %v188 = vld [vmem:[%s3 + $0x8] sm:$0xf]
    %v189 = vld [vmem:[%s3 + $0xc] sm:$0xf]
    %v190 = vld [vmem:[%s4] sm:$0x1]
    %v192 = vlaneseq
    %v193 = vshrl.u32 %v192, 7
    %v194 = vsub.s32 0, %v193
    %v195 = vrot.slane %v190, %v194
    %v201 = vunpack.c.l.b16 %v186
    %v202 = vunpack.c.l.b16 %v187
    %v203 = vunpack.c.l.b16 %v188
    %v204 = vunpack.c.l.b16 %v189
    %v205 = vpack.c.b16 %v202, %v201
    %v206 = vpack.c.b16 %v204, %v203
    %vm209 = vcmask 261120
    %v211 = vsel %vm209, %v185, 0
    %213 = vmatprep.subr.bf16.mxu0 0
    %214 = vmatpush1.bf16.msra.mxu0 %v205
    %215 = vmatprep.subr.bf16.mxu0 0
    %216 = vmatpush1.bf16.msra.mxu0 %v206
    %217 = vmatprep.subr.bf16.mxu0 0
    %218 = vmatpush1.bf16.msra.mxu0 0
    %219 = vmatprep.subr.bf16.mxu0 0
    %220 = vmatpush1.bf16.msra.mxu0 0
    %221 = vmatprep.subr.bf16.mxu0 0
    %222 = vmatpush1.bf16.msra.mxu0 0
    %223 = vmatprep.subr.bf16.mxu0 0
    %224 = vmatpush1.bf16.msra.mxu0 0
    %225 = vmatprep.subr.bf16.mxu0 0
    %226 = vmatpush1.bf16.msra.mxu0 0
    %227 = vmatprep.subr.bf16.mxu0 0
    %228 = vmatpush1.bf16.msra.mxu0 0
    %229 = vmatprep.subr.bf16.mxu0 0
    %230 = vmatpush1.bf16.msra.mxu0 0
    %231 = vmatprep.subr.bf16.mxu0 0
    %232 = vmatpush1.bf16.msra.mxu0 0
    %233 = vmatprep.subr.bf16.mxu0 0
    %234 = vmatpush1.bf16.msra.mxu0 0
    %235 = vmatprep.subr.bf16.mxu0 0
    %236 = vmatpush1.bf16.msra.mxu0 0
    %237 = vmatprep.subr.bf16.mxu0 0
    %238 = vmatpush1.bf16.msra.mxu0 0
    %239 = vmatprep.subr.bf16.mxu0 0
    %240 = vmatpush1.bf16.msra.mxu0 0
    %241 = vmatprep.subr.bf16.mxu0 0
    %242 = vmatpush1.bf16.msra.mxu0 0
    %243 = vmatprep.subr.bf16.mxu0 0
    %244 = vmatpush1.bf16.msra.mxu0 0
    %245 = vmatprep.mubr.bf16.mxu0 0
    %246 = vmatmul.mubr.bf16.gmra.mrb[0].mxu0 %v211
    %v247 = vpop.f32.mrb[0].mxu0
    %v248 = vadd.f32 %v195, %v247
    %v249 = vpop.f32.mrb[0].mxu0
    %v250 = vpop.f32.mrb[0].mxu0
    %v251 = vadd.f32 %v195, %v250
    %v252 = vpop.f32.mrb[0].mxu0
    %253 = vdwg.mxu0
    %v254 = vmax.f32 %v248, 0.0
    %v255 = vmax.f32 %v251, 0.0
    %v256 = vpack.c.bf16 %v255, %v254
    %v257 = vld [vmem:[%s5] sm:$0xf]
    %v258 = vld [vmem:[%s5 + $0x4] sm:$0xf]
    %v259 = vld [vmem:[%s5 + $0x8] sm:$0xf]
    %v260 = vld [vmem:[%s5 + $0xc] sm:$0xf]
    %v261 = vld [vmem:[%s5 + $0x10] sm:$0xf]
    %v262 = vld [vmem:[%s5 + $0x14] sm:$0xf]
    %v263 = vld [vmem:[%s5 + $0x18] sm:$0xf]
    %v264 = vld [vmem:[%s5 + $0x1c] sm:$0xf]
    %v265 = vld [vmem:[%s5 + $0x20] sm:$0xf]
    %v266 = vld [vmem:[%s5 + $0x24] sm:$0xf]
    %v267 = vld [vmem:[%s5 + $0x28] sm:$0xf]
    %v268 = vld [vmem:[%s5 + $0x2c] sm:$0xf]
    %v269 = vld [vmem:[%s5 + $0x30] sm:$0xf]
    %v270 = vld [vmem:[%s5 + $0x34] sm:$0xf]
    %v271 = vld [vmem:[%s5 + $0x38] sm:$0xf]
    %v272 = vld [vmem:[%s5 + $0x3c] sm:$0xf]
    %v273 = vld [vmem:[%s6] sm:$0x1]
    %v275 = vlaneseq
    %v276 = vshrl.u32 %v275, 7
    %v277 = vsub.s32 0, %v276
    %v278 = vrot.slane %v273, %v277
    %v296 = vunpack.c.l.b16 %v257
    %v297 = vunpack.c.l.b16 %v258
    %v298 = vunpack.c.l.b16 %v259
    %v299 = vunpack.c.l.b16 %v260
    %v300 = vunpack.c.l.b16 %v261
    %v301 = vunpack.c.l.b16 %v262
    %v302 = vunpack.c.l.b16 %v263
    %v303 = vunpack.c.l.b16 %v264
    %v304 = vunpack.c.l.b16 %v265
    %v305 = vunpack.c.l.b16 %v266
    %v306 = vunpack.c.l.b16 %v267
    %v307 = vunpack.c.l.b16 %v268
    %v308 = vunpack.c.l.b16 %v269
    %v309 = vunpack.c.l.b16 %v270
    %v310 = vunpack.c.l.b16 %v271
    %v311 = vunpack.c.l.b16 %v272
    %v312 = vpack.c.b16 %v297, %v296
    %v313 = vpack.c.b16 %v299, %v298
    %v314 = vpack.c.b16 %v301, %v300
    %v315 = vpack.c.b16 %v303, %v302
    %v316 = vpack.c.b16 %v305, %v304
    %v317 = vpack.c.b16 %v307, %v306
    %v318 = vpack.c.b16 %v309, %v308
    %v319 = vpack.c.b16 %v311, %v310
    %328 = vmatprep.subr.bf16.mxu0 0
    %329 = vmatpush1.bf16.msra.mxu0 %v312
    %330 = vmatprep.subr.bf16.mxu0 0
    %331 = vmatpush1.bf16.msra.mxu0 %v313
    %332 = vmatprep.subr.bf16.mxu0 0
    %333 = vmatpush1.bf16.msra.mxu0 %v314
    %334 = vmatprep.subr.bf16.mxu0 0
    %335 = vmatpush1.bf16.msra.mxu0 %v315
    %336 = vmatprep.subr.bf16.mxu0 0
    %337 = vmatpush1.bf16.msra.mxu0 %v316
    %338 = vmatprep.subr.bf16.mxu0 0
    %339 = vmatpush1.bf16.msra.mxu0 %v317
    %340 = vmatprep.subr.bf16.mxu0 0
    %341 = vmatpush1.bf16.msra.mxu0 %v318
    %342 = vmatprep.subr.bf16.mxu0 0
    %343 = vmatpush1.bf16.msra.mxu0 %v319
    %344 = vmatprep.subr.bf16.mxu0 0
    %345 = vmatpush1.bf16.msra.mxu0 0
    %346 = vmatprep.subr.bf16.mxu0 0
    %347 = vmatpush1.bf16.msra.mxu0 0
    %348 = vmatprep.subr.bf16.mxu0 0
    %349 = vmatpush1.bf16.msra.mxu0 0
    %350 = vmatprep.subr.bf16.mxu0 0
    %351 = vmatpush1.bf16.msra.mxu0 0
    %352 = vmatprep.subr.bf16.mxu0 0
    %353 = vmatpush1.bf16.msra.mxu0 0
    %354 = vmatprep.subr.bf16.mxu0 0
    %355 = vmatpush1.bf16.msra.mxu0 0
    %356 = vmatprep.subr.bf16.mxu0 0
    %357 = vmatpush1.bf16.msra.mxu0 0
    %358 = vmatprep.subr.bf16.mxu0 0
    %359 = vmatpush1.bf16.msra.mxu0 0
    %360 = vmatprep.mubr.bf16.mxu0 0
    %361 = vmatmul.mubr.bf16.gmra.mrb[0].mxu0 %v256
    %v362 = vpop.f32.mrb[0].mxu0
    %v363 = vadd.f32 %v278, %v362
    %v364 = vpop.f32.mrb[0].mxu0
    %v365 = vpop.f32.mrb[0].mxu0
    %v366 = vadd.f32 %v278, %v365
    %v367 = vpop.f32.mrb[0].mxu0
    %368 = vdwg.mxu0
    %v369 = vmax.f32 %v363, 0.0
    %v370 = vmax.f32 %v366, 0.0
    %v371 = vpack.c.bf16 %v370, %v369
    %v372 = vld [vmem:[%s7] sm:$0xf]
    %v373 = vld [vmem:[%s7 + $0x4] sm:$0xf]
    %v374 = vld [vmem:[%s7 + $0x8] sm:$0xf]
    %v375 = vld [vmem:[%s7 + $0xc] sm:$0xf]
    %v376 = vld [vmem:[%s8] sm:$0x1]
    %v378 = vlaneseq
    %v379 = vshrl.u32 %v378, 7
    %v380 = vsub.s32 0, %v379
    %v381 = vrot.slane %v376, %v380
    %v387 = vunpack.c.l.b16 %v372
    %v388 = vunpack.c.l.b16 %v373
    %v389 = vunpack.c.l.b16 %v374
    %v390 = vunpack.c.l.b16 %v375
    %v391 = vpack.c.b16 %v388, %v387
    %v392 = vpack.c.b16 %v390, %v389
    %v396 = vsel %vm209, %v371, 0
    %398 = vmatprep.subr.bf16.mxu0 0
    %399 = vmatpush1.bf16.msra.mxu0 %v391
    %400 = vmatprep.subr.bf16.mxu0 0
    %401 = vmatpush1.bf16.msra.mxu0 %v392
    %402 = vmatprep.subr.bf16.mxu0 0
    %403 = vmatpush1.bf16.msra.mxu0 0
    %404 = vmatprep.subr.bf16.mxu0 0
    %405 = vmatpush1.bf16.msra.mxu0 0
    %406 = vmatprep.subr.bf16.mxu0 0
    %407 = vmatpush1.bf16.msra.mxu0 0
    %408 = vmatprep.subr.bf16.mxu0 0
    %409 = vmatpush1.bf16.msra.mxu0 0
    %410 = vmatprep.subr.bf16.mxu0 0
    %411 = vmatpush1.bf16.msra.mxu0 0
    %412 = vmatprep.subr.bf16.mxu0 0
    %413 = vmatpush1.bf16.msra.mxu0 0
    %414 = vmatprep.subr.bf16.mxu0 0
    %415 = vmatpush1.bf16.msra.mxu0 0
    %416 = vmatprep.subr.bf16.mxu0 0
    %417 = vmatpush1.bf16.msra.mxu0 0
    %418 = vmatprep.subr.bf16.mxu0 0
    %419 = vmatpush1.bf16.msra.mxu0 0
    %420 = vmatprep.subr.bf16.mxu0 0
    %421 = vmatpush1.bf16.msra.mxu0 0
    %422 = vmatprep.subr.bf16.mxu0 0
    %423 = vmatpush1.bf16.msra.mxu0 0
    %424 = vmatprep.subr.bf16.mxu0 0
    %425 = vmatpush1.bf16.msra.mxu0 0
    %426 = vmatprep.subr.bf16.mxu0 0
    %427 = vmatpush1.bf16.msra.mxu0 0
    %428 = vmatprep.subr.bf16.mxu0 0
    %429 = vmatpush1.bf16.msra.mxu0 0
    %430 = vmatprep.mubr.bf16.mxu0 0
    %431 = vmatmul.mubr.bf16.gmra.mrb[0].mxu0 %v396
    %v432 = vpop.f32.mrb[0].mxu0
    %v433 = vadd.f32 %v381, %v432
    %v434 = vpop.f32.mrb[0].mxu0
    %v435 = vpop.f32.mrb[0].mxu0
    %v436 = vadd.f32 %v381, %v435
    %v437 = vpop.f32.mrb[0].mxu0
    %438 = vdwg.mxu0
    %v439 = vmax.f32 %v433, 0.0
    %v440 = vmax.f32 %v436, 0.0
    %v441 = vpack.c.bf16 %v440, %v439
    %v443 = vunpack.c.l.b16 %v441
    %v444 = vunpack.c.h.b16 %v441
    %v445 = vpack.c.b16 %v443, %v443
    %v446 = vpack.c.b16 %v444, %v444
    %449 = vst [vmem:[#allocation2] sm:$0xf] %v445
    %450 = vst [vmem:[#allocation2 + $0x4] sm:$0xf] %v446
    // Predicated region
    $region38: #{tpu_custom_call.1} parent=1 // pred_check
      _
    $region39: #{tpu_custom_call.1} parent=1 // pred_check_branch
      %452 = sbr.rel (0) target = $region41
    $region40: #{tpu_custom_call.1} parent=1 // pred_region
      %s454 = ssub.s32 128, 128
      %455 = vsyncadd [#allocation3], %s454
      %s456 = sshll.u32 [#allocation2], 4
      %s457 = int_to_ptr.vmem [resolvable:$true] %s456
      %462 = dma.vmem_to_hbm [thread:$0]  %s457, 128, %s9, [#allocation3], 64, 64, 4
    $region41: #{tpu_custom_call.1} parent=1 // pred_fallthru
      _
    // Predicated region
    $region42: #{tpu_custom_call.1} parent=1 // pred_check
      _
    $region43: #{tpu_custom_call.1} parent=1 // pred_check_branch
      %464 = sbr.rel (0) target = $region45
    $region44: #{tpu_custom_call.1} parent=1 // pred_region
      %465 = dma.done [#allocation3], 128
    $region45: #{tpu_custom_call.1} parent=1 // pred_fallthru
      _
    %466 = vsyncpa [#allocation3], 1

</llo_original>
